<compile_context>
chip_gen: v6e
topology: v6e:2x2x1
jax: 0.10.0
libtpu: 0.0.40
codegen_flags: <defaults>
</compile_context>

<pallas_src>
import functools

import jax
import jax.numpy as jnp
from jax.experimental import pallas as pl
from jax.experimental.pallas import tpu as pltpu

MARGIN = 1.0
EPS = 1e-6  # matches F.pairwise_distance / nn.TripletMarginLoss eps


def _multitask_loss_kernel(e1_ref, e2_ref, e3_ref, label_ref, out_ref,
                           sq_ap_ref, sq_an_ref, *,
                           margin, d_total, feat_chunk, mask_cols):
    k = pl.program_id(1)  # feature-chunk (reduction) axis, innermost

    @pl.when(k == 0)
    def _init():
        sq_ap_ref[...] = jnp.zeros_like(sq_ap_ref)
        sq_an_ref[...] = jnp.zeros_like(sq_an_ref)

    e1 = e1_ref[...].astype(jnp.float32)
    e2 = e2_ref[...].astype(jnp.float32)
    e3 = e3_ref[...].astype(jnp.float32)

    # F.pairwise_distance semantics: ||x1 - x2 + eps||_2 along the feature axis.
    diff_ap = e1 - e2 + EPS
    diff_an = e1 - e3 + EPS
    sq_ap = diff_ap * diff_ap
    sq_an = diff_an * diff_an

    if mask_cols:  # static: only traced when D is not a multiple of the chunk
        cols = k * feat_chunk + jax.lax.broadcasted_iota(jnp.int32, sq_ap.shape, 1)
        valid = cols < d_total
        sq_ap = jnp.where(valid, sq_ap, 0.0)
        sq_an = jnp.where(valid, sq_an, 0.0)

    sq_ap_ref[...] += jnp.sum(sq_ap, axis=-1, keepdims=True)  # (TB,1) = partial d_ap^2
    sq_an_ref[...] += jnp.sum(sq_an, axis=-1, keepdims=True)

    @pl.when(k == pl.num_programs(1) - 1)
    def _finalize():
        lbl = label_ref[...]                       # (TB, 1) f32, resident across k
        sq_p = sq_ap_ref[...]                      # d(e1,e2)^2
        d_p = jnp.sqrt(sq_p)
        d_n = jnp.sqrt(sq_an_ref[...])
        hinge_c = jnp.maximum(margin - d_p, 0.0)
        # Fused per-row loss (contrastive + triplet); wrapper takes the mean over B.
        # Rows past B in the clipped last batch tile are dropped on write-back.
        out_ref[...] = ((1.0 - lbl) * sq_p
                        + lbl * hinge_c * hinge_c
                        + jnp.maximum(d_p - d_n + margin, 0.0))


def _round_up(x, m):
    return -(-x // m) * m


def multitask_loss(emb1, emb2, emb3, label, margin=MARGIN, *,
                   batch_tile=None, feature_chunk=None):
    """emb1/emb2/emb3: (B, D) float arrays; label: (B,) float/int array."""
    B, D = emb1.shape
    itemsize = jnp.dtype(emb1.dtype).itemsize
    # Sublane packing granularity: 8 rows (4-byte), 16 (2-byte), 32 (1-byte).
    sublane = max(8, 32 // max(1, itemsize))

    # Generation-aware VMEM budget (v5e/v6e: 128 MiB physical -> ~48 MiB of tiles;
    # v7x: 64 MiB -> ~24 MiB), with the limit passed explicitly to Mosaic below.
    try:
        vmem_phys = int(getattr(pltpu.get_tpu_info(), "vmem_capacity_bytes", 0))
    except Exception:  # off-device tracing / older runtimes
        vmem_phys = 0
    if vmem_phys <= 0:
        vmem_phys = 64 * 1024 * 1024  # conservative: fits every generation
    budget = (vmem_phys * 3) // 8

    def per_row_bytes(td):
        td_pad = _round_up(td, 128)                  # lane padding of the VMEM tile
        stream = 3 * 2 * td_pad * itemsize           # 3 input streams x double buffer
        temps = 4 * td_pad * 4                       # f32 elementwise temporaries
        small = 6 * 128 * 4                          # label + output (x2 buf) + 2 scratches
        return stream + temps + small

    # Feature-axis chunk: whole rows unless even `sublane` rows would blow VMEM.
    if feature_chunk is not None:
        td = min(int(feature_chunk), D)
    elif sublane * per_row_bytes(D) > budget:
        # Very large D: tile the feature axis, targeting ~8*sublane rows per tile.
        target_rows = 8 * sublane
        bytes_per_elem = 6 * itemsize + 16
        td = (budget // target_rows - 6 * 128 * 4) // bytes_per_elem
        td = max(128, td)
    else:
        td = D
    if td < D:  # multi-chunk: chunk width must be a multiple of 128 lanes
        td = max(128, (td // 128) * 128)
        if td >= D:
            td = D

    # Batch tile: largest sublane multiple whose padded footprint fits the budget.
    if batch_tile is not None:
        tb = max(sublane, (int(batch_tile) // sublane) * sublane)
    else:
        tb = (budget // per_row_bytes(td)) // sublane * sublane
        tb = max(sublane, min(tb, 8192, _round_up(B, sublane)))

    n_b = _round_up(B, tb) // tb
    n_d = _round_up(D, td) // td

    footprint = tb * per_row_bytes(td)
    vmem_limit = int(min((vmem_phys * 7) // 8,
                         max(footprint + (8 << 20), 32 << 20)))

    label2d = label.reshape(B, 1).astype(jnp.float32)

    kernel = functools.partial(
        _multitask_loss_kernel,
        margin=float(margin), d_total=D, feat_chunk=td,
        mask_cols=(D % td != 0))

    per_row = pl.pallas_call(
        kernel,
        grid=(n_b, n_d),
        out_shape=jax.ShapeDtypeStruct((B, 1), jnp.float32),
        in_specs=[
            pl.BlockSpec((tb, td), lambda i, k: (i, k)),
            pl.BlockSpec((tb, td), lambda i, k: (i, k)),
            pl.BlockSpec((tb, td), lambda i, k: (i, k)),
            pl.BlockSpec((tb, 1), lambda i, k: (i, 0)),   # label: resident across k
        ],
        out_specs=pl.BlockSpec((tb, 1), lambda i, k: (i, 0)),
        scratch_shapes=[pltpu.VMEM((tb, 1), jnp.float32),
                        pltpu.VMEM((tb, 1), jnp.float32)],
        compiler_params=pltpu.CompilerParams(
            dimension_semantics=("parallel", "arbitrary"),
            vmem_limit_bytes=vmem_limit),
    )(emb1, emb2, emb3, label2d)

    # Both reductions in the PyTorch module are means over B and the per-row losses
    # are already fused, so one mean (tiny XLA reduction) finishes both.
    return jnp.sum(per_row) / B


def _reference(emb1, emb2, emb3, label, margin=MARGIN):
    d_ap = jnp.sqrt(jnp.sum((emb1 - emb2 + EPS) ** 2, axis=-1))
    d_an = jnp.sqrt(jnp.sum((emb1 - emb3 + EPS) ** 2, axis=-1))
    contrastive = jnp.mean((1.0 - label) * d_ap ** 2
                           + label * jnp.maximum(margin - d_ap, 0.0) ** 2)
    triplet = jnp.mean(jnp.maximum(d_ap - d_an + margin, 0.0))
    return contrastive + triplet


if __name__ == "__main__":
    keys = jax.random.split(jax.random.PRNGKey(0), 8)

    # Case 1: small shapes consistent with the module (batch=8, hidden=32).
    B, D = 8, 32
    emb1 = jax.random.normal(keys[0], (B, D), dtype=jnp.float32)
    emb2 = jax.random.normal(keys[1], (B, D), dtype=jnp.float32)
    emb3 = jax.random.normal(keys[2], (B, D), dtype=jnp.float32)
    label = (jax.random.uniform(keys[3], (B,)) > 0.5).astype(jnp.float32)

    loss = jax.block_until_ready(multitask_loss(emb1, emb2, emb3, label))
    ref = _reference(emb1, emb2, emb3, label)
    assert jnp.allclose(loss, ref, rtol=1e-4, atol=1e-4), (loss, ref)

    # Case 2: exercise the partial batch tail and the multi-chunk feature path.
    B2, D2 = 37, 200
    f1 = jax.random.normal(keys[4], (B2, D2), dtype=jnp.float32)
    f2 = jax.random.normal(keys[5], (B2, D2), dtype=jnp.float32)
    f3 = jax.random.normal(keys[6], (B2, D2), dtype=jnp.float32)
    lbl2 = (jax.random.uniform(keys[7], (B2,)) > 0.5).astype(jnp.float32)

    loss2 = jax.block_until_ready(
        multitask_loss(f1, f2, f3, lbl2, batch_tile=16, feature_chunk=128))
    ref2 = _reference(f1, f2, f3, lbl2)
    assert jnp.allclose(loss2, ref2, rtol=1e-4, atol=1e-4), (loss2, ref2)

    print("KERNEL_OK")
</pallas_src>

<mosaic_0001>
module attributes {stable_mosaic.version = 11 : i64} {
  func.func @_multitask_loss_kernel(%arg0: i32, %arg1: i32, %arg2: memref<8x32xf32, #tpu.memory_space<vmem>>, %arg3: memref<8x32xf32, #tpu.memory_space<vmem>>, %arg4: memref<8x32xf32, #tpu.memory_space<vmem>>, %arg5: memref<8x1xf32, #tpu.memory_space<vmem>>, %arg6: memref<8x1xf32, #tpu.memory_space<vmem>>, %arg7: memref<8x1xf32, #tpu.memory_space<vmem>>, %arg8: memref<8x1xf32, #tpu.memory_space<vmem>>) attributes {dimension_semantics = [#tpu.dimension_semantics<parallel>, #tpu.dimension_semantics<arbitrary>], iteration_bounds = array<i64: 1, 1>, scalar_prefetch = 0 : i64, scratch_operands = 2 : i64, tpu.core_type = #tpu.core_type<tc>, window_params = [{transform_indices = @transform_0, window_bounds = array<i64: 8, 32>}, {transform_indices = @transform_1, window_bounds = array<i64: 8, 32>}, {transform_indices = @transform_2, window_bounds = array<i64: 8, 32>}, {transform_indices = @transform_3, window_bounds = array<i64: 8, 1>}, {transform_indices = @transform_4, window_bounds = array<i64: 8, 1>}]} {
    %c0_i32 = arith.constant 0 : i32
    %0 = arith.cmpi eq, %arg1, %c0_i32 : i32
    %1 = arith.extui %0 : i1 to i32
    %c0_i32_0 = arith.constant 0 : i32
    %2 = arith.cmpi ne, %1, %c0_i32_0 : i32
    scf.if %2 {
      %cst_19 = arith.constant 0.000000e+00 : f32
      %27 = vector.broadcast %cst_19 : f32 to vector<8x1xf32>
      %c0_20 = arith.constant 0 : index
      %c0_21 = arith.constant 0 : index
      %28 = vector.load %arg7[%c0_20, %c0_21] : memref<8x1xf32, #tpu.memory_space<vmem>>, vector<8x1xf32>
      tpu.vector_store %arg7[%c0_20, %c0_21], %27 {strides = array<i32>} : memref<8x1xf32, #tpu.memory_space<vmem>>, vector<8x1xf32>,
      %cst_22 = arith.constant 0.000000e+00 : f32
      %29 = vector.broadcast %cst_22 : f32 to vector<8x1xf32>
      %c0_23 = arith.constant 0 : index
      %c0_24 = arith.constant 0 : index
      %30 = vector.load %arg8[%c0_23, %c0_24] : memref<8x1xf32, #tpu.memory_space<vmem>>, vector<8x1xf32>
      tpu.vector_store %arg8[%c0_23, %c0_24], %29 {strides = array<i32>} : memref<8x1xf32, #tpu.memory_space<vmem>>, vector<8x1xf32>,
    } else {
    }
    %c0 = arith.constant 0 : index
    %c0_1 = arith.constant 0 : index
    %3 = vector.load %arg2[%c0, %c0_1] : memref<8x32xf32, #tpu.memory_space<vmem>>, vector<8x32xf32>
    %c0_2 = arith.constant 0 : index
    %c0_3 = arith.constant 0 : index
    %4 = vector.load %arg3[%c0_2, %c0_3] : memref<8x32xf32, #tpu.memory_space<vmem>>, vector<8x32xf32>
    %c0_4 = arith.constant 0 : index
    %c0_5 = arith.constant 0 : index
    %5 = vector.load %arg4[%c0_4, %c0_5] : memref<8x32xf32, #tpu.memory_space<vmem>>, vector<8x32xf32>
    %6 = arith.subf %3, %4 : vector<8x32xf32>
    %cst = arith.constant 9.99999997E-7 : f32
    %7 = vector.broadcast %cst : f32 to vector<8x32xf32>
    %8 = arith.addf %6, %7 : vector<8x32xf32>
    %9 = arith.subf %3, %5 : vector<8x32xf32>
    %cst_6 = arith.constant 9.99999997E-7 : f32
    %10 = vector.broadcast %cst_6 : f32 to vector<8x32xf32>
    %11 = arith.addf %9, %10 : vector<8x32xf32>
    %12 = arith.mulf %8, %8 : vector<8x32xf32>
    %13 = arith.mulf %11, %11 : vector<8x32xf32>
    %c0_7 = arith.constant 0 : index
    %c0_8 = arith.constant 0 : index
    %14 = vector.load %arg7[%c0_7, %c0_8] : memref<8x1xf32, #tpu.memory_space<vmem>>, vector<8x1xf32>
    %cst_9 = arith.constant dense<0.000000e+00> : vector<8xf32>
    %15 = vector.multi_reduction <add>, %12, %cst_9 [1] : vector<8x32xf32> to vector<8xf32>
    %16 = vector.shape_cast %15 : vector<8xf32> to vector<8x1xf32>
    %17 = arith.addf %14, %16 : vector<8x1xf32>
    %c0_10 = arith.constant 0 : index
    %c0_11 = arith.constant 0 : index
    %18 = vector.load %arg7[%c0_10, %c0_11] : memref<8x1xf32, #tpu.memory_space<vmem>>, vector<8x1xf32>
    tpu.vector_store %arg7[%c0_10, %c0_11], %17 {strides = array<i32>} : memref<8x1xf32, #tpu.memory_space<vmem>>, vector<8x1xf32>,
    %c0_12 = arith.constant 0 : index
    %c0_13 = arith.constant 0 : index
    %19 = vector.load %arg8[%c0_12, %c0_13] : memref<8x1xf32, #tpu.memory_space<vmem>>, vector<8x1xf32>
    %cst_14 = arith.constant dense<0.000000e+00> : vector<8xf32>
    %20 = vector.multi_reduction <add>, %13, %cst_14 [1] : vector<8x32xf32> to vector<8xf32>
    %21 = vector.shape_cast %20 : vector<8xf32> to vector<8x1xf32>
    %22 = arith.addf %19, %21 : vector<8x1xf32>
    %c0_15 = arith.constant 0 : index
    %c0_16 = arith.constant 0 : index
    %23 = vector.load %arg8[%c0_15, %c0_16] : memref<8x1xf32, #tpu.memory_space<vmem>>, vector<8x1xf32>
    tpu.vector_store %arg8[%c0_15, %c0_16], %22 {strides = array<i32>} : memref<8x1xf32, #tpu.memory_space<vmem>>, vector<8x1xf32>,
    %c0_i32_17 = arith.constant 0 : i32
    %24 = arith.cmpi eq, %arg1, %c0_i32_17 : i32
    %25 = arith.extui %24 : i1 to i32
    %c0_i32_18 = arith.constant 0 : i32
    %26 = arith.cmpi ne, %25, %c0_i32_18 : i32
    scf.if %26 {
      %c0_19 = arith.constant 0 : index
      %c0_20 = arith.constant 0 : index
      %27 = vector.load %arg5[%c0_19, %c0_20] : memref<8x1xf32, #tpu.memory_space<vmem>>, vector<8x1xf32>
      %c0_21 = arith.constant 0 : index
      %c0_22 = arith.constant 0 : index
      %28 = vector.load %arg7[%c0_21, %c0_22] : memref<8x1xf32, #tpu.memory_space<vmem>>, vector<8x1xf32>
      %29 = math.sqrt %28 : vector<8x1xf32>
      %c0_23 = arith.constant 0 : index
      %c0_24 = arith.constant 0 : index
      %30 = vector.load %arg8[%c0_23, %c0_24] : memref<8x1xf32, #tpu.memory_space<vmem>>, vector<8x1xf32>
      %31 = math.sqrt %30 : vector<8x1xf32>
      %cst_25 = arith.constant 1.000000e+00 : f32
      %32 = vector.broadcast %cst_25 : f32 to vector<8x1xf32>
      %33 = arith.subf %32, %29 : vector<8x1xf32>
      %cst_26 = arith.constant 0.000000e+00 : f32
      %34 = vector.broadcast %cst_26 : f32 to vector<8x1xf32>
      %35 = arith.maximumf %33, %34 : vector<8x1xf32>
      %cst_27 = arith.constant 1.000000e+00 : f32
      %36 = vector.broadcast %cst_27 : f32 to vector<8x1xf32>
      %37 = arith.subf %36, %27 : vector<8x1xf32>
      %38 = arith.mulf %37, %28 : vector<8x1xf32>
      %39 = arith.mulf %27, %35 : vector<8x1xf32>
      %40 = arith.mulf %39, %35 : vector<8x1xf32>
      %41 = arith.addf %38, %40 : vector<8x1xf32>
      %42 = arith.subf %29, %31 : vector<8x1xf32>
      %cst_28 = arith.constant 1.000000e+00 : f32
      %43 = vector.broadcast %cst_28 : f32 to vector<8x1xf32>
      %44 = arith.addf %42, %43 : vector<8x1xf32>
      %cst_29 = arith.constant 0.000000e+00 : f32
      %45 = vector.broadcast %cst_29 : f32 to vector<8x1xf32>
      %46 = arith.maximumf %44, %45 : vector<8x1xf32>
      %47 = arith.addf %41, %46 : vector<8x1xf32>
      %c0_30 = arith.constant 0 : index
      %c0_31 = arith.constant 0 : index
      %48 = vector.load %arg6[%c0_30, %c0_31] : memref<8x1xf32, #tpu.memory_space<vmem>>, vector<8x1xf32>
      tpu.vector_store %arg6[%c0_30, %c0_31], %47 {strides = array<i32>} : memref<8x1xf32, #tpu.memory_space<vmem>>, vector<8x1xf32>,
    } else {
    }
    return
  }
  func.func @transform_0(%arg0: i32, %arg1: i32) -> (i32, i32) {
    %c0_i32 = arith.constant 0 : i32
    return %arg0, %arg1 : i32, i32
  }
  func.func @transform_1(%arg0: i32, %arg1: i32) -> (i32, i32) {
    %c0_i32 = arith.constant 0 : i32
    return %arg0, %arg1 : i32, i32
  }
  func.func @transform_2(%arg0: i32, %arg1: i32) -> (i32, i32) {
    %c0_i32 = arith.constant 0 : i32
    return %arg0, %arg1 : i32, i32
  }
  func.func @transform_3(%arg0: i32, %arg1: i32) -> (i32, i32) {
    %c0_i32 = arith.constant 0 : i32
    %c0_i32_0 = arith.constant 0 : i32
    return %arg0, %c0_i32 : i32, i32
  }
  func.func @transform_4(%arg0: i32, %arg1: i32) -> (i32, i32) {
    %c0_i32 = arith.constant 0 : i32
    %c0_i32_0 = arith.constant 0 : i32
    return %arg0, %c0_i32 : i32, i32
  }
}

</mosaic_0001>

<llo_original>
// kernel: tpu_custom_call.1
$region0: #{tpu_custom_call.1}
  #allocation0 [shape = 'u32[]', space=smem, size = 0x4, offset = 0x4, fixed_abs, tag = 'smem constant byte address 0x4 - core index']
  #allocation1 [shape = 'u32[144,128]{1,0:T(1,128)}', space=vmem, size = 0x12000, scoped, tag = 'internal scratch']
  #allocation2 [shape = 'f32[8,1]{1,0:T(8,128)}', space=vmem, size = 0x1000, scoped, tag = 'scratch operand']
  #allocation3 [shape = 'f32[8,1]{1,0:T(8,128)}', space=vmem, size = 0x1000, scoped, tag = 'scratch operand']
  %s0 = inlined_call_operand.vmem [shape: f32[8,32], index: 0, kind: input, shape index: {}]
  %s1 = inlined_call_operand.hbm [shape: f32[8,32], index: 1, kind: input, shape index: {}]
  %s2 = inlined_call_operand.hbm [shape: f32[8,32], index: 2, kind: input, shape index: {}]
  %s3 = inlined_call_operand.vmem [shape: f32[8,1], index: 3, kind: input, shape index: {}]
  %s4 = inlined_call_operand.vmem [shape: f32[8,1], index: 4, kind: output, shape index: {}]
  %s5 = sld [smem:[#allocation0]]
  $region42: #{tpu_custom_call.1} parent=0
    _
  %s7 = ssub.s32 1, %s5
  %s8 = scalar_select 0, %s7, %s5
  $region1: #{tpu_custom_call.1} parent=0
    #allocation4 [shape = 'u8[4096]{0}', space=vmem, size = 0x1000, scoped, tag = 'input window, operand 1, single buffered']
    #allocation5 [shape = 's32[1]{0}', space=sflag, size = 0x4, scoped, tag = 'scoped memory for tpu_custom_call.1']
    #allocation6 [shape = 'u8[4096]{0}', space=vmem, size = 0x1000, scoped, tag = 'input window, operand 2, single buffered']
    #allocation7 [shape = 's32[1]{0}', space=sflag, size = 0x4, scoped, tag = 'scoped memory for tpu_custom_call.1']
    %9 = vsyncpa [#allocation5], 0
    %10 = vsyncpa [#allocation7], 0
    // Predicated region
    $region2: #{tpu_custom_call.1} parent=1 // pred_check
      _
    $region3: #{tpu_custom_call.1} parent=1 // pred_check_branch
      %12 = sbr.rel (0) target = $region5
    $region4: #{tpu_custom_call.1} parent=1 // pred_region
      _
    $region5: #{tpu_custom_call.1} parent=1 // pred_fallthru
      _
    // Predicated region
    $region6: #{tpu_custom_call.1} parent=1 // pred_check
      _
    $region7: #{tpu_custom_call.1} parent=1 // pred_check_branch
      %14 = sbr.rel (0) target = $region9
    $region8: #{tpu_custom_call.1} parent=1 // pred_region
      %s16 = ssub.s32 128, 128
      %17 = vsyncadd [#allocation5], %s16
      %s19 = sshll.u32 [#allocation4], 4
      %s20 = int_to_ptr.vmem [resolvable:$true] %s19
      %22 = dma.hbm_to_vmem [thread:$0]  %s1, 128, %s20, [#allocation5]
    $region9: #{tpu_custom_call.1} parent=1 // pred_fallthru
      _
    // Predicated region
    $region10: #{tpu_custom_call.1} parent=1 // pred_check
      _
    $region11: #{tpu_custom_call.1} parent=1 // pred_check_branch
      %24 = sbr.rel (0) target = $region13
    $region12: #{tpu_custom_call.1} parent=1 // pred_region
      %s26 = ssub.s32 128, 128
      %27 = vsyncadd [#allocation7], %s26
      %s29 = sshll.u32 [#allocation6], 4
      %s30 = int_to_ptr.vmem [resolvable:$true] %s29
      %32 = dma.hbm_to_vmem [thread:$0]  %s2, 128, %s30, [#allocation7]
    $region13: #{tpu_custom_call.1} parent=1 // pred_fallthru
      _
    // Predicated region
    $region14: #{tpu_custom_call.1} parent=1 // pred_check
      _
    $region15: #{tpu_custom_call.1} parent=1 // pred_check_branch
      %34 = sbr.rel (0) target = $region17
    $region16: #{tpu_custom_call.1} parent=1 // pred_region
      _
    $region17: #{tpu_custom_call.1} parent=1 // pred_fallthru
      _
    // Predicated region
    $region18: #{tpu_custom_call.1} parent=1 // pred_check
      _
    $region19: #{tpu_custom_call.1} parent=1 // pred_check_branch
      %36 = sbr.rel (0) target = $region21
    $region20: #{tpu_custom_call.1} parent=1 // pred_region
      %37 = dma.done [#allocation5], 128
    $region21: #{tpu_custom_call.1} parent=1 // pred_fallthru
      _
    // Predicated region
    $region22: #{tpu_custom_call.1} parent=1 // pred_check
      _
    $region23: #{tpu_custom_call.1} parent=1 // pred_check_branch
      %39 = sbr.rel (0) target = $region25
    $region24: #{tpu_custom_call.1} parent=1 // pred_region
      %40 = dma.done [#allocation7], 128
    $region25: #{tpu_custom_call.1} parent=1 // pred_fallthru
      _
    %p41 = scmp.eq.s32.totalorder 0, 0
    // Predicated region
    $region26: #{tpu_custom_call.1} parent=1 // pred_check
      %p42 = pneg %p41
    $region27: #{tpu_custom_call.1} parent=1 // pred_check_branch
      %44 = sbr.rel (%p42) target = $region29
    $region28: #{tpu_custom_call.1} parent=1 // pred_region
      %vm45 = vcmask 7168
      %46 = vst.msk [vmem:[#allocation2] sm:$0xff] %vm45, 0.0
      %47 = vst.msk [vmem:[#allocation3] sm:$0xff] %vm45, 0.0
    $region29: #{tpu_custom_call.1} parent=1 // pred_fallthru
      _
    %v48 = vld [vmem:[%s0] sm:$0xff]
    %v49 = vld [vmem:[#allocation4] sm:$0xff]
    %v50 = vld [vmem:[#allocation6] sm:$0xff]
    %v51 = vsub.f32 %v48, %v49
    %v52 = vadd.f32 %v51, 1e-06
    %v53 = vsub.f32 %v48, %v50
    %v54 = vadd.f32 %v53, 1e-06
    %v55 = vmul.f32 %v52, %v52
    %v56 = vmul.f32 %v54, %v54
    %v57 = vld [vmem:[#allocation2] sm:$0xff]
    %vm58 = vcmask 261120
    %v59 = vsel %vm58, %v55, 0.0
    %60 = vadd.xlane.f32.xlu0 %v59
    %v61 = vpop.xlane.xlu0 %60
    %v62 = vadd.f32 %v57, %v61
    %vm63 = vcmask 7168
    %64 = vst.msk [vmem:[#allocation2] sm:$0xff] %vm63, %v62
    %v65 = vld [vmem:[#allocation3] sm:$0xff]
    %v66 = vsel %vm58, %v56, 0.0
    %67 = vadd.xlane.f32.xlu0 %v66
    %v68 = vpop.xlane.xlu0 %67
    %v69 = vadd.f32 %v65, %v68
    %70 = vst.msk [vmem:[#allocation3] sm:$0xff] %vm63, %v69
    // Predicated region
    $region30: #{tpu_custom_call.1} parent=1 // pred_check
      %p71 = pneg %p41
    $region31: #{tpu_custom_call.1} parent=1 // pred_check_branch
      %73 = sbr.rel (%p71) target = $region33
    $region32: #{tpu_custom_call.1} parent=1 // pred_region
      %v74 = vld [vmem:[%s3] sm:$0xff]
      %v75 = vld [vmem:[#allocation2] sm:$0xff]
      %v76 = vrsqrt.pop %v75
      %v77 = vmul.f32 %v75, %v76
      %vm78 = vcmp.eq.f32.partialorder %v75, inf
      %v79 = vsel %vm78, %v75, %v77
      %vm80 = vcmp.eq.f32.partialorder %v75, 0.0
      %v81 = vand.u32 %v75, 2147483648
      %v82 = vsel %vm80, %v81, %v79
      %v83 = vld [vmem:[#allocation3] sm:$0xff]
      %v84 = vrsqrt.pop %v83
      %v85 = vmul.f32 %v83, %v84
      %vm86 = vcmp.eq.f32.partialorder %v83, inf
      %v87 = vsel %vm86, %v83, %v85
      %vm88 = vcmp.eq.f32.partialorder %v83, 0.0
      %v89 = vand.u32 %v83, 2147483648
      %v90 = vsel %vm88, %v89, %v87
      %v91 = vsub.f32 1.0, %v82
      %v92 = vmax.f32 %v91, 0.0
      %v93 = vsub.f32 1.0, %v74
      %v94 = vmul.f32 %v93, %v75
      %v95 = vmul.f32 %v74, %v92
      %v96 = vmul.f32 %v95, %v92
      %v97 = vadd.f32 %v94, %v96
      %v98 = vsub.f32 %v82, %v90
      %v99 = vadd.f32 %v98, 1.0
      %v100 = vmax.f32 %v99, 0.0
      %v101 = vadd.f32 %v97, %v100
      %102 = vst.msk [vmem:[%s4] sm:$0xff] %vm63, %v101
    $region33: #{tpu_custom_call.1} parent=1 // pred_fallthru
      _
    // Predicated region
    $region34: #{tpu_custom_call.1} parent=1 // pred_check
      _
    $region35: #{tpu_custom_call.1} parent=1 // pred_check_branch
      %104 = sbr.rel (0) target = $region37
    $region36: #{tpu_custom_call.1} parent=1 // pred_region
      _
    $region37: #{tpu_custom_call.1} parent=1 // pred_fallthru
      _
    // Predicated region
    $region38: #{tpu_custom_call.1} parent=1 // pred_check
      _
    $region39: #{tpu_custom_call.1} parent=1 // pred_check_branch
      %106 = sbr.rel (0) target = $region41
    $region40: #{tpu_custom_call.1} parent=1 // pred_region
      _
    $region41: #{tpu_custom_call.1} parent=1 // pred_fallthru
      _
    %107 = vsyncpa [#allocation5], 1
    %108 = vsyncpa [#allocation7], 1

</llo_original>
